<compile_context>
chip_gen: v7x
topology: tpu7x:2x2x1
jax: 0.10.0
libtpu: 0.0.40
codegen_flags: <defaults>
</compile_context>

<pallas_src>
import jax
import jax.numpy as jnp
from jax.experimental import pallas as pl
from jax.experimental.pallas import tpu as pltpu


def decoder_mnist_kernel(x_ref, w1_ref, b1_ref, w2_ref, b2_ref, w3_ref, b3_ref,
                         mean_ref):
    x = x_ref[...]  # bf16 [TB, z_dim]

    # Linear(z_dim, h_dim) + LeakyReLU(0.01)   (bf16 operands, f32 accumulate)
    h1 = jnp.dot(x, w1_ref[...], preferred_element_type=jnp.float32) + b1_ref[...]
    h1 = jnp.where(h1 > 0, h1, 0.01 * h1).astype(jnp.bfloat16)

    # Linear(h_dim, h_dim) + LeakyReLU(0.01)
    h2 = jnp.dot(h1, w2_ref[...], preferred_element_type=jnp.float32) + b2_ref[...]
    h2 = jnp.where(h2 > 0, h2, 0.01 * h2).astype(jnp.bfloat16)

    # Linear(h_dim, 784) + Sigmoid
    logits = jnp.dot(h2, w3_ref[...], preferred_element_type=jnp.float32) + b3_ref[...]
    # sigmoid(x) = 1 / (1 + exp(-x)); exp -> EUP, approx reciprocal -> EUP,
    # so the only VALU work here is the add.  f32 math (safe on v5e).
    mean = pl.reciprocal(1.0 + jnp.exp(-logits), approx=True)
    mean_ref[...] = mean.astype(mean_ref.dtype)


def prepare_decoder_params(params_f32):
    """One-time conversion: weights -> bf16 (MXU operands), biases -> f32
    (added into the f32 accumulator).  Weights are stored as [in, out]
    (i.e. W^T of the nn.Linear weight)."""
    return {
        "w1": params_f32["w1"].astype(jnp.bfloat16),
        "w2": params_f32["w2"].astype(jnp.bfloat16),
        "w3": params_f32["w3"].astype(jnp.bfloat16),
        "b1": params_f32["b1"].astype(jnp.float32),
        "b2": params_f32["b2"].astype(jnp.float32),
        "b3": params_f32["b3"].astype(jnp.float32),
    }


def decoder_mnist_forward(x, params, *, block_b=2048, out_dtype=jnp.bfloat16):
    """x: [B, z_dim] float32.  params: output of prepare_decoder_params.

    Returns (x_mean, x_logvar), both [B, 784] in `out_dtype` (default bf16 —
    explicit precision contract with consumers; pass out_dtype=jnp.float32 if
    full-precision output writeback is required).
    """
    B, z_dim = x.shape
    h_dim = params["w1"].shape[1]
    out_dim = params["w3"].shape[1]  # 784

    # --- balanced batch tiling ------------------------------------------
    # >= 2 tiles when B >= 16 so the "parallel" grid axis shards across both
    # TensorCores on v7x; TB rounded to the 8-sublane granularity.  Padding
    # waste is bounded by < 8 rows per tile.
    n_tiles = max(pl.cdiv(B, block_b), 2 if B >= 16 else 1)
    TB = pl.cdiv(pl.cdiv(B, n_tiles), 8) * 8
    B_pad = TB * n_tiles

    xb = x.astype(jnp.bfloat16)
    if B_pad != B:
        xb = jnp.pad(xb, ((0, B_pad - B), (0, 0)))

    # Weight/bias blocks: constant block index -> VMEM-resident across steps.
    resident = lambda a: pl.BlockSpec(a.shape, lambda i: (0, 0))

    mean = pl.pallas_call(
        decoder_mnist_kernel,
        out_shape=jax.ShapeDtypeStruct((B_pad, out_dim), out_dtype),
        grid=(n_tiles,),
        in_specs=[
            pl.BlockSpec((TB, z_dim), lambda i: (i, 0)),   # x: batch-tiled
            resident(params["w1"]), resident(params["b1"]),
            resident(params["w2"]), resident(params["b2"]),
            resident(params["w3"]), resident(params["b3"]),
        ],
        # 784-wide output block (== full array dim, so the (8,128) rule is
        # satisfied); only the trailing 16 lanes per row tile are masked vst.
        out_specs=pl.BlockSpec((TB, out_dim), lambda i: (i, 0)),
        compiler_params=pltpu.CompilerParams(
            dimension_semantics=("parallel",),
            vmem_limit_bytes=32 * 1024 * 1024,
        ),
    )(xb, params["w1"], params["b1"], params["w2"], params["b2"],
      params["w3"], params["b3"])

    x_mean = mean[:B] if B_pad != B else mean
    # Constant zeros — never produced by the kernel.  If this forward is
    # jitted and output HBM traffic matters, build x_logvar outside the jit.
    x_logvar = jnp.zeros((B, out_dim), out_dtype)
    return x_mean, x_logvar


def init_params(key, z_dim, h_dim, out_dim=784):
    """PyTorch-style U[-1/sqrt(fan_in), 1/sqrt(fan_in)] init (f32 master)."""
    ks = jax.random.split(key, 6)

    def lin(kw, kb, fan_in, fan_out):
        bound = 1.0 / jnp.sqrt(fan_in)
        w = jax.random.uniform(kw, (fan_in, fan_out), jnp.float32, -bound, bound)
        b = jax.random.uniform(kb, (1, fan_out), jnp.float32, -bound, bound)
        return w, b

    w1, b1 = lin(ks[0], ks[1], z_dim, h_dim)
    w2, b2 = lin(ks[2], ks[3], h_dim, h_dim)
    w3, b3 = lin(ks[4], ks[5], h_dim, out_dim)
    return {"w1": w1, "b1": b1, "w2": w2, "b2": b2, "w3": w3, "b3": b3}


def reference_forward_bf16(x, p):
    """Mirrors the kernel numerics: bf16 matmul operands, f32 accumulation."""
    xb = x.astype(jnp.bfloat16)
    w1 = p["w1"].astype(jnp.bfloat16)
    w2 = p["w2"].astype(jnp.bfloat16)
    w3 = p["w3"].astype(jnp.bfloat16)
    h1 = jnp.dot(xb, w1, preferred_element_type=jnp.float32) + p["b1"]
    h1 = jnp.where(h1 > 0, h1, 0.01 * h1).astype(jnp.bfloat16)
    h2 = jnp.dot(h1, w2, preferred_element_type=jnp.float32) + p["b2"]
    h2 = jnp.where(h2 > 0, h2, 0.01 * h2).astype(jnp.bfloat16)
    logits = jnp.dot(h2, w3, preferred_element_type=jnp.float32) + p["b3"]
    return jax.nn.sigmoid(logits), jnp.zeros_like(logits)


def reference_forward_f32(x, p):
    h1 = x @ p["w1"] + p["b1"]
    h1 = jnp.where(h1 > 0, h1, 0.01 * h1)
    h2 = h1 @ p["w2"] + p["b2"]
    h2 = jnp.where(h2 > 0, h2, 0.01 * h2)
    logits = h2 @ p["w3"] + p["b3"]
    return jax.nn.sigmoid(logits), jnp.zeros_like(logits)


if __name__ == "__main__":
    B, Z_DIM, H_DIM = 8, 16, 32
    key = jax.random.PRNGKey(0)
    k_x, k_p = jax.random.split(key)

    x = jax.random.normal(k_x, (B, Z_DIM), jnp.float32)
    params_f32 = init_params(k_p, Z_DIM, H_DIM)
    params = prepare_decoder_params(params_f32)   # one-time bf16 conversion

    x_mean, x_logvar = decoder_mnist_forward(x, params)
    jax.block_until_ready((x_mean, x_logvar))

    ref_mean_bf16, _ = reference_forward_bf16(x, params_f32)
    ref_mean_f32, _ = reference_forward_f32(x, params_f32)

    assert x_mean.shape == (B, 784) and x_logvar.shape == (B, 784)
    xm = x_mean.astype(jnp.float32)
    # Matches the bf16-MXU reference tightly (bf16 output + approx reciprocal),
    # and the f32 reference loosely (bf16 inputs/weights).
    assert jnp.allclose(xm, ref_mean_bf16, atol=1e-2, rtol=1e-2)
    assert jnp.allclose(xm, ref_mean_f32, atol=5e-2, rtol=5e-2)
    assert jnp.all(x_logvar == 0.0)

    print("KERNEL_OK")
</pallas_src>

<mosaic_0001>
module attributes {stable_mosaic.version = 11 : i64} {
  func.func @decoder_mnist_kernel(%arg0: i32, %arg1: memref<8x16xbf16, #tpu.memory_space<vmem>>, %arg2: memref<16x32xbf16, #tpu.memory_space<vmem>>, %arg3: memref<1x32xf32, #tpu.memory_space<vmem>>, %arg4: memref<32x32xbf16, #tpu.memory_space<vmem>>, %arg5: memref<1x32xf32, #tpu.memory_space<vmem>>, %arg6: memref<32x784xbf16, #tpu.memory_space<vmem>>, %arg7: memref<1x784xf32, #tpu.memory_space<vmem>>, %arg8: memref<8x784xbf16, #tpu.memory_space<vmem>>) attributes {dimension_semantics = [#tpu.dimension_semantics<parallel>], iteration_bounds = array<i64: 1>, scalar_prefetch = 0 : i64, scratch_operands = 0 : i64, tpu.core_type = #tpu.core_type<tc>, window_params = [{transform_indices = @transform_0, window_bounds = array<i64: 8, 16>}, {pipeline_mode = #tpu.pipeline_mode<synchronous>, transform_indices = @transform_1, window_bounds = array<i64: 16, 32>}, {pipeline_mode = #tpu.pipeline_mode<synchronous>, transform_indices = @transform_2, window_bounds = array<i64: 1, 32>}, {pipeline_mode = #tpu.pipeline_mode<synchronous>, transform_indices = @transform_3, window_bounds = array<i64: 32, 32>}, {pipeline_mode = #tpu.pipeline_mode<synchronous>, transform_indices = @transform_4, window_bounds = array<i64: 1, 32>}, {pipeline_mode = #tpu.pipeline_mode<synchronous>, transform_indices = @transform_5, window_bounds = array<i64: 32, 784>}, {pipeline_mode = #tpu.pipeline_mode<synchronous>, transform_indices = @transform_6, window_bounds = array<i64: 1, 784>}, {transform_indices = @transform_7, window_bounds = array<i64: 8, 784>}]} {
    %c0 = arith.constant 0 : index
    %c0_0 = arith.constant 0 : index
    %0 = vector.load %arg1[%c0, %c0_0] : memref<8x16xbf16, #tpu.memory_space<vmem>>, vector<8x16xbf16>
    %c0_1 = arith.constant 0 : index
    %c0_2 = arith.constant 0 : index
    %1 = vector.load %arg2[%c0_1, %c0_2] : memref<16x32xbf16, #tpu.memory_space<vmem>>, vector<16x32xbf16>
    %cst = arith.constant dense<0.000000e+00> : vector<8x32xf32>
    %2 = tpu.matmul %0, %1, %cst {dimension_numbers = #tpu.dot_dimension_numbers<[1], [0], [0], [1], [0, 0, 1, 1], [], []>} : vector<8x16xbf16>, vector<16x32xbf16>, vector<8x32xf32> -> vector<8x32xf32>
    %c0_3 = arith.constant 0 : index
    %c0_4 = arith.constant 0 : index
    %3 = vector.load %arg3[%c0_3, %c0_4] : memref<1x32xf32, #tpu.memory_space<vmem>>, vector<1x32xf32>
    %4 = vector.broadcast %3 : vector<1x32xf32> to vector<8x32xf32>
    %5 = arith.addf %2, %4 : vector<8x32xf32>
    %cst_5 = arith.constant 0.000000e+00 : f32
    %6 = vector.broadcast %cst_5 : f32 to vector<8x32xf32>
    %7 = arith.cmpf ogt, %5, %6 : vector<8x32xf32>
    %cst_6 = arith.constant 0.00999999977 : f32
    %8 = vector.broadcast %cst_6 : f32 to vector<8x32xf32>
    %9 = arith.mulf %8, %5 : vector<8x32xf32>
    %10 = arith.select %7, %5, %9 : vector<8x32xi1>, vector<8x32xf32>
    %11 = arith.truncf %10 : vector<8x32xf32> to vector<8x32xbf16>
    %c0_7 = arith.constant 0 : index
    %c0_8 = arith.constant 0 : index
    %12 = vector.load %arg4[%c0_7, %c0_8] : memref<32x32xbf16, #tpu.memory_space<vmem>>, vector<32x32xbf16>
    %cst_9 = arith.constant dense<0.000000e+00> : vector<8x32xf32>
    %13 = tpu.matmul %11, %12, %cst_9 {dimension_numbers = #tpu.dot_dimension_numbers<[1], [0], [0], [1], [0, 0, 1, 1], [], []>} : vector<8x32xbf16>, vector<32x32xbf16>, vector<8x32xf32> -> vector<8x32xf32>
    %c0_10 = arith.constant 0 : index
    %c0_11 = arith.constant 0 : index
    %14 = vector.load %arg5[%c0_10, %c0_11] : memref<1x32xf32, #tpu.memory_space<vmem>>, vector<1x32xf32>
    %15 = vector.broadcast %14 : vector<1x32xf32> to vector<8x32xf32>
    %16 = arith.addf %13, %15 : vector<8x32xf32>
    %cst_12 = arith.constant 0.000000e+00 : f32
    %17 = vector.broadcast %cst_12 : f32 to vector<8x32xf32>
    %18 = arith.cmpf ogt, %16, %17 : vector<8x32xf32>
    %cst_13 = arith.constant 0.00999999977 : f32
    %19 = vector.broadcast %cst_13 : f32 to vector<8x32xf32>
    %20 = arith.mulf %19, %16 : vector<8x32xf32>
    %21 = arith.select %18, %16, %20 : vector<8x32xi1>, vector<8x32xf32>
    %22 = arith.truncf %21 : vector<8x32xf32> to vector<8x32xbf16>
    %c0_14 = arith.constant 0 : index
    %c0_15 = arith.constant 0 : index
    %23 = vector.load %arg6[%c0_14, %c0_15] : memref<32x784xbf16, #tpu.memory_space<vmem>>, vector<32x784xbf16>
    %cst_16 = arith.constant dense<0.000000e+00> : vector<8x784xf32>
    %24 = tpu.matmul %22, %23, %cst_16 {dimension_numbers = #tpu.dot_dimension_numbers<[1], [0], [0], [1], [0, 0, 1, 1], [], []>} : vector<8x32xbf16>, vector<32x784xbf16>, vector<8x784xf32> -> vector<8x784xf32>
    %c0_17 = arith.constant 0 : index
    %c0_18 = arith.constant 0 : index
    %25 = vector.load %arg7[%c0_17, %c0_18] : memref<1x784xf32, #tpu.memory_space<vmem>>, vector<1x784xf32>
    %26 = vector.broadcast %25 : vector<1x784xf32> to vector<8x784xf32>
    %27 = arith.addf %24, %26 : vector<8x784xf32>
    %cst_19 = arith.constant 0.000000e+00 : f32
    %28 = vector.broadcast %cst_19 : f32 to vector<8x784xf32>
    %29 = arith.subf %28, %27 : vector<8x784xf32>
    %30 = math.exp %29 : vector<8x784xf32>
    %cst_20 = arith.constant 1.000000e+00 : f32
    %31 = vector.broadcast %cst_20 : f32 to vector<8x784xf32>
    %32 = arith.addf %31, %30 : vector<8x784xf32>
    %33 = tpu.reciprocal %32 {approx = true} : vector<8x784xf32> -> vector<8x784xf32>
    %34 = arith.truncf %33 : vector<8x784xf32> to vector<8x784xbf16>
    %c0_21 = arith.constant 0 : index
    %c0_22 = arith.constant 0 : index
    %35 = vector.load %arg8[%c0_21, %c0_22] : memref<8x784xbf16, #tpu.memory_space<vmem>>, vector<8x784xbf16>
    tpu.vector_store %arg8[%c0_21, %c0_22], %34 {strides = array<i32>} : memref<8x784xbf16, #tpu.memory_space<vmem>>, vector<8x784xbf16>,
    return
  }
  func.func @transform_0(%arg0: i32) -> (i32, i32) {
    %c0_i32 = arith.constant 0 : i32
    %c0_i32_0 = arith.constant 0 : i32
    return %arg0, %c0_i32 : i32, i32
  }
  func.func @transform_1(%arg0: i32) -> (i32, i32) {
    %c0_i32 = arith.constant 0 : i32
    %c0_i32_0 = arith.constant 0 : i32
    %c0_i32_1 = arith.constant 0 : i32
    return %c0_i32, %c0_i32_0 : i32, i32
  }
  func.func @transform_2(%arg0: i32) -> (i32, i32) {
    %c0_i32 = arith.constant 0 : i32
    %c0_i32_0 = arith.constant 0 : i32
    %c0_i32_1 = arith.constant 0 : i32
    return %c0_i32, %c0_i32_0 : i32, i32
  }
  func.func @transform_3(%arg0: i32) -> (i32, i32) {
    %c0_i32 = arith.constant 0 : i32
    %c0_i32_0 = arith.constant 0 : i32
    %c0_i32_1 = arith.constant 0 : i32
    return %c0_i32, %c0_i32_0 : i32, i32
  }
  func.func @transform_4(%arg0: i32) -> (i32, i32) {
    %c0_i32 = arith.constant 0 : i32
    %c0_i32_0 = arith.constant 0 : i32
    %c0_i32_1 = arith.constant 0 : i32
    return %c0_i32, %c0_i32_0 : i32, i32
  }
  func.func @transform_5(%arg0: i32) -> (i32, i32) {
    %c0_i32 = arith.constant 0 : i32
    %c0_i32_0 = arith.constant 0 : i32
    %c0_i32_1 = arith.constant 0 : i32
    return %c0_i32, %c0_i32_0 : i32, i32
  }
  func.func @transform_6(%arg0: i32) -> (i32, i32) {
    %c0_i32 = arith.constant 0 : i32
    %c0_i32_0 = arith.constant 0 : i32
    %c0_i32_1 = arith.constant 0 : i32
    return %c0_i32, %c0_i32_0 : i32, i32
  }
  func.func @transform_7(%arg0: i32) -> (i32, i32) {
    %c0_i32 = arith.constant 0 : i32
    %c0_i32_0 = arith.constant 0 : i32
    return %arg0, %c0_i32 : i32, i32
  }
}

</mosaic_0001>

<llo_original>
// kernel: tpu_custom_call.1
$region0: #{tpu_custom_call.1}
  #allocation0 [shape = 'u32[]', space=smem, size = 0x4, offset = 0x4, fixed_abs, tag = 'smem constant byte address 0x4 - core index']
  #allocation1 [shape = 'u32[144,128]{1,0:T(1,128)}', space=vmem, size = 0x12000, scoped, tag = 'internal scratch']
  %s0 = inlined_call_operand.hbm [shape: bf16[8,16], index: 0, kind: input, shape index: {}]
  %s1 = inlined_call_operand.hbm [shape: bf16[16,32], index: 1, kind: input, shape index: {}]
  %s2 = inlined_call_operand.vmem [shape: f32[1,32], index: 2, kind: input, shape index: {}]
  %s3 = inlined_call_operand.hbm [shape: bf16[32,32], index: 3, kind: input, shape index: {}]
  %s4 = inlined_call_operand.vmem [shape: f32[1,32], index: 4, kind: input, shape index: {}]
  %s5 = inlined_call_operand.hbm [shape: bf16[32,784], index: 5, kind: input, shape index: {}]
  %s6 = inlined_call_operand.vmem [shape: f32[1,784], index: 6, kind: input, shape index: {}]
  %s7 = inlined_call_operand.hbm [shape: bf16[8,784], index: 7, kind: output, shape index: {}]
  %s8 = sld [smem:[#allocation0]]
  $region54: #{tpu_custom_call.1} parent=0
    _
  %s10 = ssub.s32 1, %s8
  %s11 = scalar_select 0, %s10, %s8
  $region1: #{tpu_custom_call.1} parent=0
    #allocation2 [shape = 'u8[2048]{0}', space=vmem, size = 0x800, scoped, tag = 'input window, operand 0, single buffered']
    #allocation3 [shape = 's32[1]{0}', space=sflag, size = 0x4, scoped, tag = 'scoped memory for tpu_custom_call.1']
    #allocation4 [shape = 's32[1]{0}', space=sflag, size = 0x4, scoped, tag = 'scoped memory for tpu_custom_call.1']
    #allocation5 [shape = 'u8[4096]{0}', space=vmem, size = 0x1000, scoped, tag = 'input window, operand 1, single buffered']
    #allocation6 [shape = 's32[1]{0}', space=sflag, size = 0x4, scoped, tag = 'scoped memory for tpu_custom_call.1']
    #allocation7 [shape = 'u8[8192]{0}', space=vmem, size = 0x2000, scoped, tag = 'input window, operand 3, single buffered']
    #allocation8 [shape = 'u8[57344]{0}', space=vmem, size = 0xe000, scoped, tag = 'input window, operand 5, single buffered']
    #allocation9 [shape = 's32[1]{0}', space=sflag, size = 0x4, scoped, tag = 'scoped memory for tpu_custom_call.1']
    #allocation10 [shape = 'u8[14336]{0}', space=vmem, size = 0x3800, scoped, tag = 'output window, operand 0, single buffered']
    %12 = vsyncpa [#allocation3], 0
    %13 = vsyncpa [#allocation6], 0
    %14 = vsyncpa [#allocation9], 0
    %15 = vsyncpa [#allocation4], 0
    // Predicated region
    $region2: #{tpu_custom_call.1} parent=1 // pred_check
      _
    $region3: #{tpu_custom_call.1} parent=1 // pred_check_branch
      %17 = sbr.rel (0) target = $region5
    $region4: #{tpu_custom_call.1} parent=1 // pred_region
      %s19 = ssub.s32 64, 64
      %20 = vsyncadd [#allocation3], %s19
      %s22 = sshll.u32 [#allocation2], 4
      %s23 = int_to_ptr.vmem [resolvable:$true] %s22
      %25 = dma.hbm_to_vmem [thread:$0]  %s0, 64, %s23, [#allocation3]
    $region5: #{tpu_custom_call.1} parent=1 // pred_fallthru
      _
    // Predicated region
    $region6: #{tpu_custom_call.1} parent=1 // pred_check
      _
    $region7: #{tpu_custom_call.1} parent=1 // pred_check_branch
      %27 = sbr.rel (0) target = $region9
    $region8: #{tpu_custom_call.1} parent=1 // pred_region
      %s29 = ssub.s32 128, 128
      %30 = vsyncadd [#allocation6], %s29
      %s31 = sshll.u32 [#allocation5], 4
      %s32 = int_to_ptr.vmem [resolvable:$true] %s31
      %37 = dma.hbm_to_vmem [thread:$0]  %s1, 128, %s32, [#allocation6], 64, 64, 4
    $region9: #{tpu_custom_call.1} parent=1 // pred_fallthru
      _
    // Predicated region
    $region10: #{tpu_custom_call.1} parent=1 // pred_check
      _
    $region11: #{tpu_custom_call.1} parent=1 // pred_check_branch
      %39 = sbr.rel (0) target = $region13
    $region12: #{tpu_custom_call.1} parent=1 // pred_region
      _
    $region13: #{tpu_custom_call.1} parent=1 // pred_fallthru
      _
    // Predicated region
    $region14: #{tpu_custom_call.1} parent=1 // pred_check
      _
    $region15: #{tpu_custom_call.1} parent=1 // pred_check_branch
      %41 = sbr.rel (0) target = $region17
    $region16: #{tpu_custom_call.1} parent=1 // pred_region
      %s43 = ssub.s32 256, 256
      %44 = vsyncadd [#allocation6], %s43
      %s45 = sshll.u32 [#allocation7], 4
      %s46 = int_to_ptr.vmem [resolvable:$true] %s45
      %51 = dma.hbm_to_vmem [thread:$0]  %s3, 256, %s46, [#allocation6], 64, 64, 4
    $region17: #{tpu_custom_call.1} parent=1 // pred_fallthru
      _
    // Predicated region
    $region18: #{tpu_custom_call.1} parent=1 // pred_check
      _
    $region19: #{tpu_custom_call.1} parent=1 // pred_check_branch
      %53 = sbr.rel (0) target = $region21
    $region20: #{tpu_custom_call.1} parent=1 // pred_region
      _
    $region21: #{tpu_custom_call.1} parent=1 // pred_fallthru
      _
    // Predicated region
    $region22: #{tpu_custom_call.1} parent=1 // pred_check
      _
    $region23: #{tpu_custom_call.1} parent=1 // pred_check_branch
      %55 = sbr.rel (0) target = $region25
    $region24: #{tpu_custom_call.1} parent=1 // pred_region
      %s57 = ssub.s32 1792, 1792
      %58 = vsyncadd [#allocation9], %s57
      %s59 = sshll.u32 [#allocation8], 4
      %s60 = int_to_ptr.vmem [resolvable:$true] %s59
      %65 = dma.hbm_to_vmem [thread:$0]  %s5, 1792, %s60, [#allocation9], 448, 448, 28
    $region25: #{tpu_custom_call.1} parent=1 // pred_fallthru
      _
    // Predicated region
    $region26: #{tpu_custom_call.1} parent=1 // pred_check
      _
    $region27: #{tpu_custom_call.1} parent=1 // pred_check_branch
      %67 = sbr.rel (0) target = $region29
    $region28: #{tpu_custom_call.1} parent=1 // pred_region
      _
    $region29: #{tpu_custom_call.1} parent=1 // pred_fallthru
      _
    // Predicated region
    $region30: #{tpu_custom_call.1} parent=1 // pred_check
      _
    $region31: #{tpu_custom_call.1} parent=1 // pred_check_branch
      %69 = sbr.rel (0) target = $region33
    $region32: #{tpu_custom_call.1} parent=1 // pred_region
      %70 = dma.done [#allocation3], 64
    $region33: #{tpu_custom_call.1} parent=1 // pred_fallthru
      _
    // Predicated region
    $region34: #{tpu_custom_call.1} parent=1 // pred_check
      _
    $region35: #{tpu_custom_call.1} parent=1 // pred_check_branch
      %72 = sbr.rel (0) target = $region37
    $region36: #{tpu_custom_call.1} parent=1 // pred_region
      %73 = dma.done [#allocation6], 128
    $region37: #{tpu_custom_call.1} parent=1 // pred_fallthru
      _
    // Predicated region
    $region38: #{tpu_custom_call.1} parent=1 // pred_check
      _
    $region39: #{tpu_custom_call.1} parent=1 // pred_check_branch
      %75 = sbr.rel (0) target = $region41
    $region40: #{tpu_custom_call.1} parent=1 // pred_region
      %76 = dma.done [#allocation6], 256
    $region41: #{tpu_custom_call.1} parent=1 // pred_fallthru
      _
    // Predicated region
    $region42: #{tpu_custom_call.1} parent=1 // pred_check
      _
    $region43: #{tpu_custom_call.1} parent=1 // pred_check_branch
      %78 = sbr.rel (0) target = $region45
    $region44: #{tpu_custom_call.1} parent=1 // pred_region
      %79 = dma.done [#allocation9], 1792
    $region45: #{tpu_custom_call.1} parent=1 // pred_fallthru
      _
    %v81 = vld [vmem:[#allocation2] sm:$0xf]
    %v82 = vld [vmem:[#allocation5] sm:$0xf]
    %v83 = vld [vmem:[#allocation5 + $0x4] sm:$0xf]
    %v84 = vld [vmem:[%s2] sm:$0x1]
    %v86 = vlaneseq
    %v87 = vshrl.u32 %v86, 7
    %v88 = vsub.s32 0, %v87
    %v89 = vrot.slane %v84, %v88
    %v93 = vunpack.c.l.b16 %v82
    %v94 = vunpack.c.l.b16 %v83
    %v95 = vpack.c.b16 %v94, %v93
    %vm97 = vcmask 130048
    %v99 = vsel %vm97, %v81, 0
    %101 = vmatprep.subr.bf16.mxu0 0
    %102 = vmatpush1.bf16.msra.mxu0 %v95
    %103 = vmatprep.subr.bf16.mxu0 0
    %104 = vmatpush1.bf16.msra.mxu0 0
    %105 = vmatprep.subr.bf16.mxu0 0
    %106 = vmatpush1.bf16.msra.mxu0 0
    %107 = vmatprep.subr.bf16.mxu0 0
    %108 = vmatpush1.bf16.msra.mxu0 0
    %109 = vmatprep.subr.bf16.mxu0 0
    %110 = vmatpush1.bf16.msra.mxu0 0
    %111 = vmatprep.subr.bf16.mxu0 0
    %112 = vmatpush1.bf16.msra.mxu0 0
    %113 = vmatprep.subr.bf16.mxu0 0
    %114 = vmatpush1.bf16.msra.mxu0 0
    %115 = vmatprep.subr.bf16.mxu0 0
    %116 = vmatpush1.bf16.msra.mxu0 0
    %117 = vmatprep.subr.bf16.mxu0 0
    %118 = vmatpush1.bf16.msra.mxu0 0
    %119 = vmatprep.subr.bf16.mxu0 0
    %120 = vmatpush1.bf16.msra.mxu0 0
    %121 = vmatprep.subr.bf16.mxu0 0
    %122 = vmatpush1.bf16.msra.mxu0 0
    %123 = vmatprep.subr.bf16.mxu0 0
    %124 = vmatpush1.bf16.msra.mxu0 0
    %125 = vmatprep.subr.bf16.mxu0 0
    %126 = vmatpush1.bf16.msra.mxu0 0
    %127 = vmatprep.subr.bf16.mxu0 0
    %128 = vmatpush1.bf16.msra.mxu0 0
    %129 = vmatprep.subr.bf16.mxu0 0
    %130 = vmatpush1.bf16.msra.mxu0 0
    %131 = vmatprep.subr.bf16.mxu0 0
    %132 = vmatpush1.bf16.msra.mxu0 0
    %133 = vmatprep.mubr.bf16.mxu0 0
    %134 = vmatmul.mubr.bf16.gmra.mrb[0].mxu0 %v99
    %v135 = vpop.f32.mrb[0].mxu0
    %v136 = vadd.f32 %v89, %v135
    %v137 = vpop.f32.mrb[0].mxu0
    %v138 = vpop.f32.mrb[0].mxu0
    %v139 = vpop.f32.mrb[0].mxu0
    %140 = vdwg.mxu0
    %vm141 = vcmp.gt.f32.partialorder %v136, 0.0
    %v142 = vmul.f32 %v136, 0.01
    %v143 = vsel %vm141, %v136, %v142
    %v144 = vpack.c.bf16 %v143, %v143
    %v145 = vld [vmem:[#allocation7] sm:$0xf]
    %v146 = vld [vmem:[#allocation7 + $0x4] sm:$0xf]
    %v147 = vld [vmem:[#allocation7 + $0x8] sm:$0xf]
    %v148 = vld [vmem:[#allocation7 + $0xc] sm:$0xf]
    %v149 = vld [vmem:[%s4] sm:$0x1]
    %v151 = vlaneseq
    %v152 = vshrl.u32 %v151, 7
    %v153 = vsub.s32 0, %v152
    %v154 = vrot.slane %v149, %v153
    %v160 = vunpack.c.l.b16 %v145
    %v161 = vunpack.c.l.b16 %v146
    %v162 = vunpack.c.l.b16 %v147
    %v163 = vunpack.c.l.b16 %v148
    %v164 = vpack.c.b16 %v161, %v160
    %v165 = vpack.c.b16 %v163, %v162
    %vm168 = vcmask 261120
    %v170 = vsel %vm168, %v144, 0
    %172 = vmatprep.subr.bf16.mxu0 0
    %173 = vmatpush1.bf16.msra.mxu0 %v164
    %174 = vmatprep.subr.bf16.mxu0 0
    %175 = vmatpush1.bf16.msra.mxu0 %v165
    %176 = vmatprep.subr.bf16.mxu0 0
    %177 = vmatpush1.bf16.msra.mxu0 0
    %178 = vmatprep.subr.bf16.mxu0 0
    %179 = vmatpush1.bf16.msra.mxu0 0
    %180 = vmatprep.subr.bf16.mxu0 0
    %181 = vmatpush1.bf16.msra.mxu0 0
    %182 = vmatprep.subr.bf16.mxu0 0
    %183 = vmatpush1.bf16.msra.mxu0 0
    %184 = vmatprep.subr.bf16.mxu0 0
    %185 = vmatpush1.bf16.msra.mxu0 0
    %186 = vmatprep.subr.bf16.mxu0 0
    %187 = vmatpush1.bf16.msra.mxu0 0
    %188 = vmatprep.subr.bf16.mxu0 0
    %189 = vmatpush1.bf16.msra.mxu0 0
    %190 = vmatprep.subr.bf16.mxu0 0
    %191 = vmatpush1.bf16.msra.mxu0 0
    %192 = vmatprep.subr.bf16.mxu0 0
    %193 = vmatpush1.bf16.msra.mxu0 0
    %194 = vmatprep.subr.bf16.mxu0 0
    %195 = vmatpush1.bf16.msra.mxu0 0
    %196 = vmatprep.subr.bf16.mxu0 0
    %197 = vmatpush1.bf16.msra.mxu0 0
    %198 = vmatprep.subr.bf16.mxu0 0
    %199 = vmatpush1.bf16.msra.mxu0 0
    %200 = vmatprep.subr.bf16.mxu0 0
    %201 = vmatpush1.bf16.msra.mxu0 0
    %202 = vmatprep.subr.bf16.mxu0 0
    %203 = vmatpush1.bf16.msra.mxu0 0
    %204 = vmatprep.mubr.bf16.mxu0 0
    %205 = vmatmul.mubr.bf16.gmra.mrb[0].mxu0 %v170
    %v206 = vpop.f32.mrb[0].mxu0
    %v207 = vadd.f32 %v154, %v206
    %v208 = vpop.f32.mrb[0].mxu0
    %v209 = vpop.f32.mrb[0].mxu0
    %v210 = vpop.f32.mrb[0].mxu0
    %211 = vdwg.mxu0
    %vm212 = vcmp.gt.f32.partialorder %v207, 0.0
    %v213 = vmul.f32 %v207, 0.01
    %v214 = vsel %vm212, %v207, %v213
    %v215 = vpack.c.bf16 %v214, %v214
    %v216 = vld [vmem:[#allocation8] sm:$0xff]
    %v217 = vld [vmem:[#allocation8 + $0x8] sm:$0xff]
    %v218 = vld [vmem:[#allocation8 + $0x10] sm:$0xff]
    %v219 = vld [vmem:[#allocation8 + $0x18] sm:$0xf]
    %v220 = vld [vmem:[#allocation8 + $0x1c] sm:$0xff]
    %v221 = vld [vmem:[#allocation8 + $0x24] sm:$0xff]
    %v222 = vld [vmem:[#allocation8 + $0x2c] sm:$0xff]
    %v223 = vld [vmem:[#allocation8 + $0x34] sm:$0xf]
    %v224 = vld [vmem:[#allocation8 + $0x38] sm:$0xff]
    %v225 = vld [vmem:[#allocation8 + $0x40] sm:$0xff]
    %v226 = vld [vmem:[#allocation8 + $0x48] sm:$0xff]
    %v227 = vld [vmem:[#allocation8 + $0x50] sm:$0xf]
    %v228 = vld [vmem:[#allocation8 + $0x54] sm:$0xff]
    %v229 = vld [vmem:[#allocation8 + $0x5c] sm:$0xff]
    %v230 = vld [vmem:[#allocation8 + $0x64] sm:$0xff]
    %v231 = vld [vmem:[#allocation8 + $0x6c] sm:$0xf]
    %v232 = vld [vmem:[%s6] sm:$0x7f]
    %v234 = vlaneseq
    %v235 = vshrl.u32 %v234, 7
    %v236 = vsub.s32 0, %v235
    %v237 = vrot.slane %v232, %v236
    %v238 = vlaneseq
    %v239 = vshrl.u32 %v238, 7
    %v240 = vsub.s32 1, %v239
    %v241 = vrot.slane %v232, %v240
    %v242 = vlaneseq
    %v243 = vshrl.u32 %v242, 7
    %v244 = vsub.s32 2, %v243
    %v245 = vrot.slane %v232, %v244
    %v246 = vlaneseq
    %v247 = vshrl.u32 %v246, 7
    %v248 = vsub.s32 3, %v247
    %v249 = vrot.slane %v232, %v248
    %v250 = vlaneseq
    %v251 = vshrl.u32 %v250, 7
    %v252 = vsub.s32 4, %v251
    %v253 = vrot.slane %v232, %v252
    %v254 = vlaneseq
    %v255 = vshrl.u32 %v254, 7
    %v256 = vsub.s32 5, %v255
    %v257 = vrot.slane %v232, %v256
    %v258 = vlaneseq
    %v259 = vshrl.u32 %v258, 7
    %v260 = vsub.s32 6, %v259
    %v261 = vrot.slane %v232, %v260
    %v285 = vunpack.c.l.b16 %v216
    %v286 = vunpack.c.h.b16 %v216
    %v287 = vunpack.c.l.b16 %v217
    %v288 = vunpack.c.h.b16 %v217
    %v289 = vunpack.c.l.b16 %v218
    %v290 = vunpack.c.h.b16 %v218
    %v291 = vunpack.c.l.b16 %v219
    %v292 = vunpack.c.l.b16 %v220
    %v293 = vunpack.c.h.b16 %v220
    %v294 = vunpack.c.l.b16 %v221
    %v295 = vunpack.c.h.b16 %v221
    %v296 = vunpack.c.l.b16 %v222
    %v297 = vunpack.c.h.b16 %v222
    %v298 = vunpack.c.l.b16 %v223
    %v299 = vunpack.c.l.b16 %v224
    %v300 = vunpack.c.h.b16 %v224
    %v301 = vunpack.c.l.b16 %v225
    %v302 = vunpack.c.h.b16 %v225
    %v303 = vunpack.c.l.b16 %v226
    %v304 = vunpack.c.h.b16 %v226
    %v305 = vunpack.c.l.b16 %v227
    %v306 = vunpack.c.l.b16 %v228
    %v307 = vunpack.c.h.b16 %v228
    %v308 = vunpack.c.l.b16 %v229
    %v309 = vunpack.c.h.b16 %v229
    %v310 = vunpack.c.l.b16 %v230
    %v311 = vunpack.c.h.b16 %v230
    %v312 = vunpack.c.l.b16 %v231
    %v313 = vpack.c.b16 %v292, %v285
    %v314 = vpack.c.b16 %v293, %v286
    %v315 = vpack.c.b16 %v294, %v287
    %v316 = vpack.c.b16 %v295, %v288
    %v317 = vpack.c.b16 %v296, %v289
    %v318 = vpack.c.b16 %v297, %v290
    %v319 = vpack.c.b16 %v298, %v291
    %v320 = vpack.c.b16 %v306, %v299
    %v321 = vpack.c.b16 %v307, %v300
    %v322 = vpack.c.b16 %v308, %v301
    %v323 = vpack.c.b16 %v309, %v302
    %v324 = vpack.c.b16 %v310, %v303
    %v325 = vpack.c.b16 %v311, %v304
    %v326 = vpack.c.b16 %v312, %v305
    %v342 = vsel %vm168, %v215, 0
    %344 = vmatprep.subr.bf16.mxu0 %v314
    %345 = vmatpush1.bf16.msra.mxu0 %v313
    %346 = vmatprep.subr.bf16.mxu0 %v321
    %347 = vmatpush1.bf16.msra.mxu0 %v320
    %348 = vmatprep.subr.bf16.mxu0 0
    %349 = vmatpush1.bf16.msra.mxu0 0
    %350 = vmatprep.subr.bf16.mxu0 0
    %351 = vmatpush1.bf16.msra.mxu0 0
    %352 = vmatprep.subr.bf16.mxu0 0
    %353 = vmatpush1.bf16.msra.mxu0 0
    %354 = vmatprep.subr.bf16.mxu0 0
    %355 = vmatpush1.bf16.msra.mxu0 0
    %356 = vmatprep.subr.bf16.mxu0 0
    %357 = vmatpush1.bf16.msra.mxu0 0
    %358 = vmatprep.subr.bf16.mxu0 0
    %359 = vmatpush1.bf16.msra.mxu0 0
    %360 = vmatprep.subr.bf16.mxu0 0
    %361 = vmatpush1.bf16.msra.mxu0 0
    %362 = vmatprep.subr.bf16.mxu0 0
    %363 = vmatpush1.bf16.msra.mxu0 0
    %364 = vmatprep.subr.bf16.mxu0 0
    %365 = vmatpush1.bf16.msra.mxu0 0
    %366 = vmatprep.subr.bf16.mxu0 0
    %367 = vmatpush1.bf16.msra.mxu0 0
    %368 = vmatprep.subr.bf16.mxu0 0
    %369 = vmatpush1.bf16.msra.mxu0 0
    %370 = vmatprep.subr.bf16.mxu0 0
    %371 = vmatpush1.bf16.msra.mxu0 0
    %372 = vmatprep.subr.bf16.mxu0 0
    %373 = vmatpush1.bf16.msra.mxu0 0
    %374 = vmatprep.subr.bf16.mxu0 0
    %375 = vmatpush1.bf16.msra.mxu0 0
    %376 = vmatprep.mubr.bf16.mxu0 0
    %377 = vmatmul.mubr.bf16.gmra.mrb[0].mxu0 %v342
    %v378 = vpop.f32.mrb[0].mxu0
    %v379 = vadd.f32 %v237, %v378
    %v380 = vpop.f32.mrb[0].mxu0
    %v381 = vadd.f32 %v241, %v380
    %v382 = vpop.f32.mrb[0].mxu0
    %v383 = vpop.f32.mrb[0].mxu0
    %384 = vdwg.mxu0
    %385 = vmatprep.subr.bf16.mxu0 %v316
    %386 = vmatpush1.bf16.msra.mxu0 %v315
    %387 = vmatprep.subr.bf16.mxu0 %v323
    %388 = vmatpush1.bf16.msra.mxu0 %v322
    %389 = vmatprep.subr.bf16.mxu0 0
    %390 = vmatpush1.bf16.msra.mxu0 0
    %391 = vmatprep.subr.bf16.mxu0 0
    %392 = vmatpush1.bf16.msra.mxu0 0
    %393 = vmatprep.subr.bf16.mxu0 0
    %394 = vmatpush1.bf16.msra.mxu0 0
    %395 = vmatprep.subr.bf16.mxu0 0
    %396 = vmatpush1.bf16.msra.mxu0 0
    %397 = vmatprep.subr.bf16.mxu0 0
    %398 = vmatpush1.bf16.msra.mxu0 0
    %399 = vmatprep.subr.bf16.mxu0 0
    %400 = vmatpush1.bf16.msra.mxu0 0
    %401 = vmatprep.subr.bf16.mxu0 0
    %402 = vmatpush1.bf16.msra.mxu0 0
    %403 = vmatprep.subr.bf16.mxu0 0
    %404 = vmatpush1.bf16.msra.mxu0 0
    %405 = vmatprep.subr.bf16.mxu0 0
    %406 = vmatpush1.bf16.msra.mxu0 0
    %407 = vmatprep.subr.bf16.mxu0 0
    %408 = vmatpush1.bf16.msra.mxu0 0
    %409 = vmatprep.subr.bf16.mxu0 0
    %410 = vmatpush1.bf16.msra.mxu0 0
    %411 = vmatprep.subr.bf16.mxu0 0
    %412 = vmatpush1.bf16.msra.mxu0 0
    %413 = vmatprep.subr.bf16.mxu0 0
    %414 = vmatpush1.bf16.msra.mxu0 0
    %415 = vmatprep.subr.bf16.mxu0 0
    %416 = vmatpush1.bf16.msra.mxu0 0
    %417 = vmatprep.mubr.bf16.mxu0 0
    %418 = vmatmul.mubr.bf16.gmra.mrb[0].mxu0 %v342
    %v419 = vpop.f32.mrb[0].mxu0
    %v420 = vadd.f32 %v245, %v419
    %v421 = vpop.f32.mrb[0].mxu0
    %v422 = vadd.f32 %v249, %v421
    %v423 = vpop.f32.mrb[0].mxu0
    %v424 = vpop.f32.mrb[0].mxu0
    %425 = vdwg.mxu0
    %426 = vmatprep.subr.bf16.mxu0 %v318
    %427 = vmatpush1.bf16.msra.mxu0 %v317
    %428 = vmatprep.subr.bf16.mxu0 %v325
    %429 = vmatpush1.bf16.msra.mxu0 %v324
    %430 = vmatprep.subr.bf16.mxu0 0
    %431 = vmatpush1.bf16.msra.mxu0 0
    %432 = vmatprep.subr.bf16.mxu0 0
    %433 = vmatpush1.bf16.msra.mxu0 0
    %434 = vmatprep.subr.bf16.mxu0 0
    %435 = vmatpush1.bf16.msra.mxu0 0
    %436 = vmatprep.subr.bf16.mxu0 0
    %437 = vmatpush1.bf16.msra.mxu0 0
    %438 = vmatprep.subr.bf16.mxu0 0
    %439 = vmatpush1.bf16.msra.mxu0 0
    %440 = vmatprep.subr.bf16.mxu0 0
    %441 = vmatpush1.bf16.msra.mxu0 0
    %442 = vmatprep.subr.bf16.mxu0 0
    %443 = vmatpush1.bf16.msra.mxu0 0
    %444 = vmatprep.subr.bf16.mxu0 0
    %445 = vmatpush1.bf16.msra.mxu0 0
    %446 = vmatprep.subr.bf16.mxu0 0
    %447 = vmatpush1.bf16.msra.mxu0 0
    %448 = vmatprep.subr.bf16.mxu0 0
    %449 = vmatpush1.bf16.msra.mxu0 0
    %450 = vmatprep.subr.bf16.mxu0 0
    %451 = vmatpush1.bf16.msra.mxu0 0
    %452 = vmatprep.subr.bf16.mxu0 0
    %453 = vmatpush1.bf16.msra.mxu0 0
    %454 = vmatprep.subr.bf16.mxu0 0
    %455 = vmatpush1.bf16.msra.mxu0 0
    %456 = vmatprep.subr.bf16.mxu0 0
    %457 = vmatpush1.bf16.msra.mxu0 0
    %458 = vmatprep.mubr.bf16.mxu0 0
    %459 = vmatmul.mubr.bf16.gmra.mrb[0].mxu0 %v342
    %v460 = vpop.f32.mrb[0].mxu0
    %v461 = vadd.f32 %v253, %v460
    %v462 = vpop.f32.mrb[0].mxu0
    %v463 = vadd.f32 %v257, %v462
    %v464 = vpop.f32.mrb[0].mxu0
    %v465 = vpop.f32.mrb[0].mxu0
    %466 = vdwg.mxu0
    %467 = vmatprep.subr.bf16.mxu0 0
    %468 = vmatpush1.bf16.msra.mxu0 %v319
    %469 = vmatprep.subr.bf16.mxu0 0
    %470 = vmatpush1.bf16.msra.mxu0 %v326
    %471 = vmatprep.subr.bf16.mxu0 0
    %472 = vmatpush1.bf16.msra.mxu0 0
    %473 = vmatprep.subr.bf16.mxu0 0
    %474 = vmatpush1.bf16.msra.mxu0 0
    %475 = vmatprep.subr.bf16.mxu0 0
    %476 = vmatpush1.bf16.msra.mxu0 0
    %477 = vmatprep.subr.bf16.mxu0 0
    %478 = vmatpush1.bf16.msra.mxu0 0
    %479 = vmatprep.subr.bf16.mxu0 0
    %480 = vmatpush1.bf16.msra.mxu0 0
    %481 = vmatprep.subr.bf16.mxu0 0
    %482 = vmatpush1.bf16.msra.mxu0 0
    %483 = vmatprep.subr.bf16.mxu0 0
    %484 = vmatpush1.bf16.msra.mxu0 0
    %485 = vmatprep.subr.bf16.mxu0 0
    %486 = vmatpush1.bf16.msra.mxu0 0
    %487 = vmatprep.subr.bf16.mxu0 0
    %488 = vmatpush1.bf16.msra.mxu0 0
    %489 = vmatprep.subr.bf16.mxu0 0
    %490 = vmatpush1.bf16.msra.mxu0 0
    %491 = vmatprep.subr.bf16.mxu0 0
    %492 = vmatpush1.bf16.msra.mxu0 0
    %493 = vmatprep.subr.bf16.mxu0 0
    %494 = vmatpush1.bf16.msra.mxu0 0
    %495 = vmatprep.subr.bf16.mxu0 0
    %496 = vmatpush1.bf16.msra.mxu0 0
    %497 = vmatprep.subr.bf16.mxu0 0
    %498 = vmatpush1.bf16.msra.mxu0 0
    %499 = vmatprep.mubr.bf16.mxu0 0
    %500 = vmatmul.mubr.bf16.gmra.mrb[0].mxu0 %v342
    %v501 = vpop.f32.mrb[0].mxu0
    %v502 = vadd.f32 %v261, %v501
    %v503 = vpop.f32.mrb[0].mxu0
    %v504 = vpop.f32.mrb[0].mxu0
    %v505 = vpop.f32.mrb[0].mxu0
    %506 = vdwg.mxu0
    %v507 = vsub.f32 0.0, %v379
    %v508 = vsub.f32 0.0, %v381
    %v509 = vsub.f32 0.0, %v420
    %v510 = vsub.f32 0.0, %v422
    %v511 = vsub.f32 0.0, %v461
    %v512 = vsub.f32 0.0, %v463
    %v513 = vsub.f32 0.0, %v502
    %v514 = vmul.f32 %v507, 1.442695
    %v515 = vpow.pop %v514
    %v516 = vmul.f32 %v508, 1.442695
    %v517 = vpow.pop %v516
    %v518 = vmul.f32 %v509, 1.442695
    %v519 = vpow.pop %v518
    %v520 = vmul.f32 %v510, 1.442695
    %v521 = vpow.pop %v520
    %v522 = vmul.f32 %v511, 1.442695
    %v523 = vpow.pop %v522
    %v524 = vmul.f32 %v512, 1.442695
    %v525 = vpow.pop %v524
    %v526 = vmul.f32 %v513, 1.442695
    %v527 = vpow.pop %v526
    %v528 = vadd.f32 %v515, 1.0
    %v529 = vadd.f32 %v517, 1.0
    %v530 = vadd.f32 %v519, 1.0
    %v531 = vadd.f32 %v521, 1.0
    %v532 = vadd.f32 %v523, 1.0
    %v533 = vadd.f32 %v525, 1.0
    %v534 = vadd.f32 %v527, 1.0
    %v535 = vrcp.pop %v528
    %v536 = vrcp.pop %v529
    %v537 = vrcp.pop %v530
    %v538 = vrcp.pop %v531
    %v539 = vrcp.pop %v532
    %v540 = vrcp.pop %v533
    %v541 = vrcp.pop %v534
    %v542 = vpack.c.bf16 %v535, %v535
    %v543 = vpack.c.bf16 %v536, %v536
    %v544 = vpack.c.bf16 %v537, %v537
    %v545 = vpack.c.bf16 %v538, %v538
    %v546 = vpack.c.bf16 %v539, %v539
    %v547 = vpack.c.bf16 %v540, %v540
    %v548 = vpack.c.bf16 %v541, %v541
    %v556 = vunpack.c.l.b16 %v542
    %v557 = vunpack.c.l.b16 %v543
    %v558 = vunpack.c.l.b16 %v544
    %v559 = vunpack.c.l.b16 %v545
    %v560 = vunpack.c.l.b16 %v546
    %v561 = vunpack.c.l.b16 %v547
    %v562 = vunpack.c.l.b16 %v548
    %v563 = vpack.c.b16 %v557, %v556
    %v564 = vpack.c.b16 %v559, %v558
    %v565 = vpack.c.b16 %v561, %v560
    %v566 = vpack.c.b16 %v562, %v562
    %571 = vst [vmem:[#allocation10] sm:$0xff] %v563
    %572 = vst [vmem:[#allocation10 + $0x8] sm:$0xff] %v564
    %573 = vst [vmem:[#allocation10 + $0x10] sm:$0xff] %v565
    %vm574 = vcmask 125952
    %575 = vst.msk [vmem:[#allocation10 + $0x18] sm:$0xf] %vm574, %v566
    // Predicated region
    $region46: #{tpu_custom_call.1} parent=1 // pred_check
      _
    $region47: #{tpu_custom_call.1} parent=1 // pred_check_branch
      %577 = sbr.rel (0) target = $region49
    $region48: #{tpu_custom_call.1} parent=1 // pred_region
      %s579 = ssub.s32 448, 448
      %580 = vsyncadd [#allocation4], %s579
      %s582 = sshll.u32 [#allocation10], 4
      %s583 = int_to_ptr.vmem [resolvable:$true] %s582
      %585 = dma.vmem_to_hbm [thread:$0]  %s583, 448, %s7, [#allocation4]
    $region49: #{tpu_custom_call.1} parent=1 // pred_fallthru
      _
    // Predicated region
    $region50: #{tpu_custom_call.1} parent=1 // pred_check
      _
    $region51: #{tpu_custom_call.1} parent=1 // pred_check_branch
      %587 = sbr.rel (0) target = $region53
    $region52: #{tpu_custom_call.1} parent=1 // pred_region
      %588 = dma.done [#allocation4], 448
    $region53: #{tpu_custom_call.1} parent=1 // pred_fallthru
      _
    %589 = vsyncpa [#allocation3], 1
    %590 = vsyncpa [#allocation6], 1
    %591 = vsyncpa [#allocation9], 1
    %592 = vsyncpa [#allocation4], 1

</llo_original>
